<compile_context>
chip_gen: v7x
topology: tpu7x:2x2x1
jax: 0.10.0
libtpu: 0.0.40
codegen_flags: <defaults>
</compile_context>

<pallas_src>
import functools

import jax
import jax.numpy as jnp
from jax import lax
from jax.experimental import pallas as pl
from jax.experimental.pallas import tpu as pltpu


def _sobelxy_kernel(x_ref, o_ref, *, H, W):
    x = x_ref[...].astype(jnp.float32)            # (TS, L), L = H*W
    TS, L = x.shape

    # ---- horizontal (+/-1 within each W-wide row segment) shifts, lane axis ----
    if W == 1:
        xl = jnp.zeros_like(x)
        xr = jnp.zeros_like(x)
    else:
        col = lax.broadcasted_iota(jnp.int32, (1, L), 1) % W
        zc = jnp.zeros((TS, 1), jnp.float32)
        # Shift by one lane; only the image-border columns are wrong and those
        # are exactly the ones zeroed by the masks (= the conv's zero padding).
        xl = jnp.where(col != 0, jnp.concatenate([zc, x[:, :-1]], axis=1), 0.0)
        xr = jnp.where(col != W - 1, jnp.concatenate([x[:, 1:], zc], axis=1), 0.0)

    # ---- vertical (+/-W) shifts: the prepended/appended zero row IS the padding ----
    if H == 1:
        def up(v):
            return jnp.zeros_like(v)

        def down(v):
            return jnp.zeros_like(v)
    else:
        zrow = jnp.zeros((TS, W), jnp.float32)

        def up(v):      # v[., h-1, :]
            return jnp.concatenate([zrow, v[:, :-W]], axis=1)

        def down(v):    # v[., h+1, :]
            return jnp.concatenate([v[:, W:], zrow], axis=1)

    # sobel-y first so its temporaries die before the sobel-x path is built.
    s = xl + x + x + xr                            # row filter [1, 2, 1]
    out = jnp.abs(up(s) - down(s))                 # col filter [1, 0, -1]  -> sobel-y
    d = xl - xr                                    # row filter [1, 0, -1]
    out = out + jnp.abs(up(d) + d + d + down(d))   # col filter [1, 2, 1]  -> sobel-x

    o_ref[...] = out.astype(o_ref.dtype)


def _vmem_budget():
    """Return (vmem_limit_bytes, per-block byte budget) derived from the chip."""
    try:
        cap = int(pltpu.get_tpu_info().vmem_capacity_bytes)
    except Exception:
        cap = 64 * 1024 * 1024  # conservative (v7x-sized) fallback
    vmem_limit = min((cap * 3) // 4, 96 * 1024 * 1024)
    # 2x double-buffered input + output blocks plus ~6 live block-sized temps
    # and headroom -> block gets ~1/16 of the scoped limit (>= 1 MiB).
    block_budget = max(1 << 20, vmem_limit // 16)
    return vmem_limit, block_budget


def _pick_row_tile(rows, per_row_bytes, budget_bytes):
    """Row-tile over the flattened N*C axis (no halo needed across rows)."""
    ts = max(1, budget_bytes // max(per_row_bytes, 1))
    if ts >= rows:
        if rows >= 16:
            # keep >= 2 grid steps so the "parallel" axis can shard across cores
            ts = max(8, ((rows // 2) // 8) * 8)
        else:
            ts = rows
    else:
        ts = min(max(8, (ts // 8) * 8), rows)  # sublane-aligned partial blocks ok
    return ts


def juanji_sobelxy(x):
    """x: (N, C, H, W) float -> |sobel_x(x)| + |sobel_y(x)|, same shape/dtype."""
    N, C, H, W = x.shape
    rows, L = N * C, H * W
    xf = x.reshape(rows, L)                        # free: contiguous view

    vmem_limit, budget = _vmem_budget()
    ts = _pick_row_tile(rows, L * x.dtype.itemsize, budget)
    grid = (pl.cdiv(rows, ts),)

    kernel = functools.partial(_sobelxy_kernel, H=H, W=W)

    out = pl.pallas_call(
        kernel,
        out_shape=jax.ShapeDtypeStruct((rows, L), x.dtype),
        grid_spec=pl.GridSpec(
            grid=grid,
            in_specs=[pl.BlockSpec((ts, L), lambda r: (r, 0))],
            out_specs=pl.BlockSpec((ts, L), lambda r: (r, 0)),
        ),
        compiler_params=pltpu.CompilerParams(
            dimension_semantics=("parallel",),
            vmem_limit_bytes=vmem_limit,
        ),
        cost_estimate=pl.CostEstimate(
            flops=11 * rows * L,
            transcendentals=0,
            bytes_accessed=2 * rows * L * x.dtype.itemsize,
        ),
    )(xf)
    return out.reshape(N, C, H, W)


def _reference(x):
    """Pure-JAX reference: depthwise conv (NCHW, OIHW) with the Sobel taps."""
    N, C, H, W = x.shape
    sobel = jnp.array([[1, 0, -1], [2, 0, -2], [1, 0, -1]], dtype=jnp.float32)

    def dwconv(inp, filt):
        w = jnp.broadcast_to(filt[None, None, :, :], (C, 1, 3, 3))
        return lax.conv_general_dilated(
            inp, w, window_strides=(1, 1), padding=((1, 1), (1, 1)),
            feature_group_count=C,
            dimension_numbers=("NCHW", "OIHW", "NCHW"))

    return jnp.abs(dwconv(x, sobel)) + jnp.abs(dwconv(x, sobel.T))


if __name__ == "__main__":
    key = jax.random.PRNGKey(0)
    x = jax.random.normal(key, (2, 4, 16, 16), dtype=jnp.float32)

    out = jax.block_until_ready(juanji_sobelxy(x))
    ref = jax.block_until_ready(_reference(x))

    assert out.shape == ref.shape and out.dtype == ref.dtype
    assert jnp.allclose(out, ref, atol=1e-4, rtol=1e-4), "mismatch vs reference"

    print("KERNEL_OK")
</pallas_src>

<mosaic_0001>
module attributes {stable_mosaic.version = 11 : i64} {
  func.func @_sobelxy_kernel(%arg0: i32, %arg1: memref<8x256xf32, #tpu.memory_space<vmem>>, %arg2: memref<8x256xf32, #tpu.memory_space<vmem>>) attributes {dimension_semantics = [#tpu.dimension_semantics<parallel>], iteration_bounds = array<i64: 1>, scalar_prefetch = 0 : i64, scratch_operands = 0 : i64, tpu.core_type = #tpu.core_type<tc>, window_params = [{transform_indices = @transform_0, window_bounds = array<i64: 8, 256>}, {transform_indices = @transform_1, window_bounds = array<i64: 8, 256>}]} {
    %c0 = arith.constant 0 : index
    %c0_0 = arith.constant 0 : index
    %0 = vector.load %arg1[%c0, %c0_0] : memref<8x256xf32, #tpu.memory_space<vmem>>, vector<8x256xf32>
    %1 = tpu.iota {dimensions = array<i32: 1>} : vector<1x256xi32>
    %c16_i32 = arith.constant 16 : i32
    %c0_i32 = arith.constant 0 : i32
    %2 = arith.cmpi eq, %c16_i32, %c0_i32 : i32
    %c1_i32 = arith.constant 1 : i32
    %3 = arith.select %2, %c1_i32, %c16_i32 : i32
    %4 = vector.broadcast %3 : i32 to vector<1x256xi32>
    %5 = arith.remsi %1, %4 : vector<1x256xi32>
    %c0_i32_1 = arith.constant 0 : i32
    %6 = vector.broadcast %c0_i32_1 : i32 to vector<1x256xi32>
    %7 = arith.cmpi ne, %5, %6 : vector<1x256xi32>
    %c0_i32_2 = arith.constant 0 : i32
    %8 = vector.broadcast %c0_i32_2 : i32 to vector<1x256xi32>
    %9 = arith.cmpi slt, %5, %8 : vector<1x256xi32>
    %c0_i32_3 = arith.constant 0 : i32
    %10 = arith.cmpi slt, %3, %c0_i32_3 : i32
    %11 = vector.broadcast %10 : i1 to vector<1x256xi1>
    %12 = vector.broadcast %11 : vector<1x256xi1> to vector<1x256xi1>
    %13 = arith.xori %9, %12 : vector<1x256xi1>
    %14 = arith.andi %13, %7 : vector<1x256xi1>
    %15 = vector.broadcast %3 : i32 to vector<1x256xi32>
    %16 = arith.addi %5, %15 : vector<1x256xi32>
    %17 = arith.select %14, %16, %5 : vector<1x256xi1>, vector<1x256xi32>
    %cst = arith.constant 0.000000e+00 : f32
    %18 = vector.broadcast %cst : f32 to vector<8x1xf32>
    %c0_i32_4 = arith.constant 0 : i32
    %19 = vector.broadcast %c0_i32_4 : i32 to vector<1x256xi32>
    %20 = arith.cmpi ne, %17, %19 : vector<1x256xi32>
    %21 = vector.extract_strided_slice %0 {offsets = [0, 0], sizes = [8, 255], strides = [1, 1]} : vector<8x256xf32> to vector<8x255xf32>
    %22 = tpu.concatenate %18, %21 in 1 : vector<8x1xf32>, vector<8x255xf32> -> vector<8x256xf32>
    %cst_5 = arith.constant 0.000000e+00 : f32
    %23 = vector.shape_cast %20 : vector<1x256xi1> to vector<1x256xi1>
    %24 = vector.broadcast %23 : vector<1x256xi1> to vector<8x256xi1>
    %25 = vector.broadcast %cst_5 : f32 to vector<8x256xf32>
    %26 = arith.select %24, %22, %25 : vector<8x256xi1>, vector<8x256xf32>
    %c15_i32 = arith.constant 15 : i32
    %27 = vector.broadcast %c15_i32 : i32 to vector<1x256xi32>
    %28 = arith.cmpi ne, %17, %27 : vector<1x256xi32>
    %29 = vector.extract_strided_slice %0 {offsets = [0, 1], sizes = [8, 255], strides = [1, 1]} : vector<8x256xf32> to vector<8x255xf32>
    %30 = tpu.concatenate %29, %18 in 1 : vector<8x255xf32>, vector<8x1xf32> -> vector<8x256xf32>
    %cst_6 = arith.constant 0.000000e+00 : f32
    %31 = vector.shape_cast %28 : vector<1x256xi1> to vector<1x256xi1>
    %32 = vector.broadcast %31 : vector<1x256xi1> to vector<8x256xi1>
    %33 = vector.broadcast %cst_6 : f32 to vector<8x256xf32>
    %34 = arith.select %32, %30, %33 : vector<8x256xi1>, vector<8x256xf32>
    %cst_7 = arith.constant 0.000000e+00 : f32
    %35 = vector.broadcast %cst_7 : f32 to vector<8x16xf32>
    %36 = arith.addf %26, %0 : vector<8x256xf32>
    %37 = arith.addf %36, %0 : vector<8x256xf32>
    %38 = arith.addf %37, %34 : vector<8x256xf32>
    %39 = vector.extract_strided_slice %38 {offsets = [0, 0], sizes = [8, 240], strides = [1, 1]} : vector<8x256xf32> to vector<8x240xf32>
    %40 = tpu.concatenate %35, %39 in 1 : vector<8x16xf32>, vector<8x240xf32> -> vector<8x256xf32>
    %41 = vector.extract_strided_slice %38 {offsets = [0, 16], sizes = [8, 240], strides = [1, 1]} : vector<8x256xf32> to vector<8x240xf32>
    %42 = tpu.concatenate %41, %35 in 1 : vector<8x240xf32>, vector<8x16xf32> -> vector<8x256xf32>
    %43 = arith.subf %40, %42 : vector<8x256xf32>
    %44 = math.absf %43 : vector<8x256xf32>
    %45 = arith.subf %26, %34 : vector<8x256xf32>
    %46 = vector.extract_strided_slice %45 {offsets = [0, 0], sizes = [8, 240], strides = [1, 1]} : vector<8x256xf32> to vector<8x240xf32>
    %47 = tpu.concatenate %35, %46 in 1 : vector<8x16xf32>, vector<8x240xf32> -> vector<8x256xf32>
    %48 = arith.addf %47, %45 : vector<8x256xf32>
    %49 = arith.addf %48, %45 : vector<8x256xf32>
    %50 = vector.extract_strided_slice %45 {offsets = [0, 16], sizes = [8, 240], strides = [1, 1]} : vector<8x256xf32> to vector<8x240xf32>
    %51 = tpu.concatenate %50, %35 in 1 : vector<8x240xf32>, vector<8x16xf32> -> vector<8x256xf32>
    %52 = arith.addf %49, %51 : vector<8x256xf32>
    %53 = math.absf %52 : vector<8x256xf32>
    %54 = arith.addf %44, %53 : vector<8x256xf32>
    %c0_8 = arith.constant 0 : index
    %c0_9 = arith.constant 0 : index
    %55 = vector.load %arg2[%c0_8, %c0_9] : memref<8x256xf32, #tpu.memory_space<vmem>>, vector<8x256xf32>
    tpu.vector_store %arg2[%c0_8, %c0_9], %54 {strides = array<i32>} : memref<8x256xf32, #tpu.memory_space<vmem>>, vector<8x256xf32>,
    return
  }
  func.func @transform_0(%arg0: i32) -> (i32, i32) {
    %c0_i32 = arith.constant 0 : i32
    %c0_i32_0 = arith.constant 0 : i32
    return %arg0, %c0_i32 : i32, i32
  }
  func.func @transform_1(%arg0: i32) -> (i32, i32) {
    %c0_i32 = arith.constant 0 : i32
    %c0_i32_0 = arith.constant 0 : i32
    return %arg0, %c0_i32 : i32, i32
  }
}

</mosaic_0001>

<llo_original>
// kernel: tpu_custom_call.1
$region0: #{tpu_custom_call.1}
  #allocation0 [shape = 'u32[]', space=smem, size = 0x4, offset = 0x4, fixed_abs, tag = 'smem constant byte address 0x4 - core index']
  #allocation1 [shape = 'u32[144,128]{1,0:T(1,128)}', space=vmem, size = 0x12000, scoped, tag = 'internal scratch']
  %s0 = inlined_call_operand.hbm [shape: f32[8,256], index: 0, kind: input, shape index: {}]
  %s1 = inlined_call_operand.hbm [shape: f32[8,256], index: 1, kind: output, shape index: {}]
  %s2 = sld [smem:[#allocation0]]
  $region18: #{tpu_custom_call.1} parent=0
    _
  %s4 = ssub.s32 1, %s2
  %s5 = scalar_select 0, %s4, %s2
  $region1: #{tpu_custom_call.1} parent=0
    #allocation2 [shape = 'u8[8192]{0}', space=vmem, size = 0x2000, scoped, tag = 'input window, operand 0, single buffered']
    #allocation3 [shape = 's32[1]{0}', space=sflag, size = 0x4, scoped, tag = 'scoped memory for tpu_custom_call.1']
    #allocation4 [shape = 's32[1]{0}', space=sflag, size = 0x4, scoped, tag = 'scoped memory for tpu_custom_call.1']
    #allocation5 [shape = 'u8[8192]{0}', space=vmem, size = 0x2000, scoped, tag = 'output window, operand 0, single buffered']
    %6 = vsyncpa [#allocation3], 0
    %7 = vsyncpa [#allocation4], 0
    // Predicated region
    $region2: #{tpu_custom_call.1} parent=1 // pred_check
      _
    $region3: #{tpu_custom_call.1} parent=1 // pred_check_branch
      %9 = sbr.rel (0) target = $region5
    $region4: #{tpu_custom_call.1} parent=1 // pred_region
      %s11 = ssub.s32 256, 256
      %12 = vsyncadd [#allocation3], %s11
      %s14 = sshll.u32 [#allocation2], 4
      %s15 = int_to_ptr.vmem [resolvable:$true] %s14
      %17 = dma.hbm_to_vmem [thread:$0]  %s0, 256, %s15, [#allocation3]
    $region5: #{tpu_custom_call.1} parent=1 // pred_fallthru
      _
    // Predicated region
    $region6: #{tpu_custom_call.1} parent=1 // pred_check
      _
    $region7: #{tpu_custom_call.1} parent=1 // pred_check_branch
      %19 = sbr.rel (0) target = $region9
    $region8: #{tpu_custom_call.1} parent=1 // pred_region
      %20 = dma.done [#allocation3], 256
    $region9: #{tpu_custom_call.1} parent=1 // pred_fallthru
      _
    %v21 = vld [vmem:[#allocation2] sm:$0xff]
    %v22 = vld [vmem:[#allocation2 + $0x8] sm:$0xff]
    %v23 = vlaneseq
    %v24 = vand.u32 %v23, 127
    %v25 = vadd.s32 %v24, 128
    %vm26 = vcmp.lt.s32.totalorder %v24, 0
    %v27 = vsub.s32 0, %v24
    %v28 = vsel %vm26, %v27, %v24
    %v29 = vshrl.u32 %v28, 4
    %v30 = vand.u32 %v28, 15
    %v31 = vsub.s32 0, %v30
    %v32 = vsel %vm26, %v31, %v30
    %vm33 = vcmp.lt.s32.totalorder %v25, 0
    %v34 = vsub.s32 0, %v25
    %v35 = vsel %vm33, %v34, %v25
    %v36 = vshrl.u32 %v35, 4
    %v37 = vand.u32 %v35, 15
    %v38 = vsub.s32 0, %v37
    %v39 = vsel %vm33, %v38, %v37
    %vm40 = vcmp.ne.s32.totalorder %v32, 0
    %vm41 = vcmp.ne.s32.totalorder %v39, 0
    %vm42 = vcmp.lt.s32.totalorder %v32, 0
    %vm43 = vcmp.lt.s32.totalorder %v39, 0
    %vm44 = vmand %vm42, %vm40
    %vm45 = vmand %vm43, %vm41
    %v46 = vadd.s32 %v32, 16
    %v47 = vadd.s32 %v39, 16
    %v48 = vsel %vm44, %v46, %v32
    %v49 = vsel %vm45, %v47, %v39
    %vm50 = vcmp.ne.s32.totalorder %v48, 0
    %vm51 = vcmp.ne.s32.totalorder %v49, 0
    %54 = vrot.lane.b32.xlu0 %v21, 1
    %v55 = vpop.permute.xlu0 %54
    %56 = vrot.lane.b32.xlu0 %v22, 1
    %v57 = vpop.permute.xlu0 %56
    %vm58 = vcmask 7168
    %v59 = vsel %vm58, %v55, %v57
    %v62 = vsel %vm58, 0.0, %v55
    %v63 = vsel %vm50, 1, 0
    %v64 = vsel %vm51, 1, 0
    %vm65 = vcmp.eq.s32.totalorder %v63, 1
    %vm66 = vcmp.eq.s32.totalorder %v64, 1
    %v67 = vsel %vm65, %v62, 0.0
    %v68 = vsel %vm66, %v59, 0.0
    %vm69 = vcmp.ne.s32.totalorder %v48, 15
    %vm70 = vcmp.ne.s32.totalorder %v49, 15
    %71 = vrot.lane.b32.xlu0 %v21, 127
    %v72 = vpop.permute.xlu0 %71
    %73 = vrot.lane.b32.xlu0 %v22, 127
    %v74 = vpop.permute.xlu0 %73
    %vm75 = vcmask 1039360
    %v76 = vsel %vm75, %v72, %v74
    %v79 = vsel %vm75, %v74, 0.0
    %v80 = vsel %vm69, 1, 0
    %v81 = vsel %vm70, 1, 0
    %vm82 = vcmp.eq.s32.totalorder %v80, 1
    %vm83 = vcmp.eq.s32.totalorder %v81, 1
    %v84 = vsel %vm82, %v76, 0.0
    %v85 = vsel %vm83, %v79, 0.0
    %v86 = vadd.f32 %v67, %v21
    %v87 = vadd.f32 %v68, %v22
    %v88 = vadd.f32 %v86, %v21
    %v89 = vadd.f32 %v87, %v22
    %v90 = vadd.f32 %v88, %v84
    %v91 = vadd.f32 %v89, %v85
    %94 = vrot.lane.b32.xlu0 %v90, 16
    %v95 = vpop.permute.xlu0 %94
    %96 = vrot.lane.b32.xlu0 %v91, 16
    %v97 = vpop.permute.xlu0 %96
    %vm98 = vcmask 130048
    %v99 = vsel %vm98, %v95, %v97
    %v102 = vsel %vm98, 0.0, %v95
    %103 = vrot.lane.b32.xlu0 %v90, 112
    %v104 = vpop.permute.xlu0 %103
    %105 = vrot.lane.b32.xlu0 %v91, 112
    %v106 = vpop.permute.xlu0 %105
    %vm107 = vcmask 916480
    %v108 = vsel %vm107, %v104, %v106
    %v111 = vsel %vm107, %v106, 0.0
    %v112 = vsub.f32 %v102, %v108
    %v113 = vsub.f32 %v99, %v111
    %v114 = vand.u32 2147483647, %v112
    %v115 = vand.u32 2147483647, %v113
    %v116 = vsub.f32 %v67, %v84
    %v117 = vsub.f32 %v68, %v85
    %120 = vrot.lane.b32.xlu0 %v116, 16
    %v121 = vpop.permute.xlu0 %120
    %122 = vrot.lane.b32.xlu0 %v117, 16
    %v123 = vpop.permute.xlu0 %122
    %v124 = vsel %vm98, %v121, %v123
    %v127 = vsel %vm98, 0.0, %v121
    %v128 = vadd.f32 %v127, %v116
    %v129 = vadd.f32 %v124, %v117
    %v130 = vadd.f32 %v128, %v116
    %v131 = vadd.f32 %v129, %v117
    %132 = vrot.lane.b32.xlu0 %v116, 112
    %v133 = vpop.permute.xlu0 %132
    %134 = vrot.lane.b32.xlu0 %v117, 112
    %v135 = vpop.permute.xlu0 %134
    %v136 = vsel %vm107, %v133, %v135
    %v139 = vsel %vm107, %v135, 0.0
    %v140 = vadd.f32 %v130, %v136
    %v141 = vadd.f32 %v131, %v139
    %v142 = vand.u32 2147483647, %v140
    %v143 = vand.u32 2147483647, %v141
    %v144 = vadd.f32 %v114, %v142
    %v145 = vadd.f32 %v115, %v143
    %146 = vst [vmem:[#allocation5] sm:$0xff] %v144
    %147 = vst [vmem:[#allocation5 + $0x8] sm:$0xff] %v145
    // Predicated region
    $region10: #{tpu_custom_call.1} parent=1 // pred_check
      _
    $region11: #{tpu_custom_call.1} parent=1 // pred_check_branch
      %149 = sbr.rel (0) target = $region13
    $region12: #{tpu_custom_call.1} parent=1 // pred_region
      %s151 = ssub.s32 256, 256
      %152 = vsyncadd [#allocation4], %s151
      %s154 = sshll.u32 [#allocation5], 4
      %s155 = int_to_ptr.vmem [resolvable:$true] %s154
      %157 = dma.vmem_to_hbm [thread:$0]  %s155, 256, %s1, [#allocation4]
    $region13: #{tpu_custom_call.1} parent=1 // pred_fallthru
      _
    // Predicated region
    $region14: #{tpu_custom_call.1} parent=1 // pred_check
      _
    $region15: #{tpu_custom_call.1} parent=1 // pred_check_branch
      %159 = sbr.rel (0) target = $region17
    $region16: #{tpu_custom_call.1} parent=1 // pred_region
      %160 = dma.done [#allocation4], 256
    $region17: #{tpu_custom_call.1} parent=1 // pred_fallthru
      _
    %161 = vsyncpa [#allocation3], 1
    %162 = vsyncpa [#allocation4], 1

</llo_original>
